<compile_context>
chip_gen: v7x
topology: tpu7x:2x2x1
jax: 0.10.0
libtpu: 0.0.40
codegen_flags: <defaults>
</compile_context>

<pallas_src>
import functools

import jax
import jax.numpy as jnp
from jax.experimental import pallas as pl
from jax.experimental.pallas import tpu as pltpu

H1, H2 = 400, 300
DROP_P = 0.1
KEEP_SCALE = 1.0 / (1.0 - DROP_P)


def _round_up(x, m):
    return (x + m - 1) // m * m


def critic_dropout_kernel(s_ref, a_ref,
                          w1s_ref, w1a_ref, b1_ref,
                          w2_ref, b2_ref,
                          w3_ref, b3_ref,
                          u1_ref, u2_ref,
                          o_ref):
    # ---- layer 1: cat([state, action]) @ W1 == state @ W1[:sd] + action @ W1[sd:]
    h = (jnp.dot(s_ref[...].astype(jnp.bfloat16), w1s_ref[...],
                 preferred_element_type=jnp.float32)
         + jnp.dot(a_ref[...].astype(jnp.bfloat16), w1a_ref[...],
                   preferred_element_type=jnp.float32)
         + b1_ref[...])
    h = jnp.maximum(h, 0.0)
    # inverted dropout: keep with prob 1-p, scale kept activations by 1/(1-p)
    h = jnp.where(u1_ref[...] >= DROP_P, h * KEEP_SCALE, 0.0)

    # ---- layer 2
    h = jnp.dot(h.astype(jnp.bfloat16), w2_ref[...],
                preferred_element_type=jnp.float32) + b2_ref[...]
    h = jnp.maximum(h, 0.0)
    h = jnp.where(u2_ref[...] >= DROP_P, h * KEEP_SCALE, 0.0)

    # ---- layer 3 (H2 -> 1): elementwise mult + cross-lane reduce (w3 stored as (1, H2))
    o_ref[...] = jnp.sum(h * w3_ref[...], axis=-1, keepdims=True) + b3_ref[...]


@jax.jit
def critic_dropout_forward(state, action, params, dropout_key):
    w1, b1, w2, b2, w3, b3 = params
    batch, state_dim = state.shape
    action_dim = action.shape[1]

    # Batch tile: MXU-friendly (256) for large batches, minimal (multiple of 8)
    # padding for small ones.  Per-tile VMEM is < 1 MiB, comfortably inside the
    # 64 MiB (v7x) / 128 MiB (v5e/v6e) budgets.
    tb = min(256, _round_up(batch, 8))
    batch_p = _round_up(batch, tb)
    grid = (batch_p // tb,)

    pad = batch_p - batch
    if pad:
        state = jnp.pad(state, ((0, pad), (0, 0)))
        action = jnp.pad(action, ((0, pad), (0, 0)))

    # Dropout randomness from jax.random (portable; the in-kernel hardware PRNG
    # (pltpu.prng_*) does not lower in interpret/CPU mode).
    # TODO(synk): torch's nn.Dropout RNG stream cannot be reproduced bit-exactly.
    k1, k2 = jax.random.split(dropout_key)
    u1 = jax.random.uniform(k1, (batch_p, H1), jnp.float32)
    u2 = jax.random.uniform(k2, (batch_p, H2), jnp.float32)

    # bf16 MXU operands (accumulation stays f32 in the kernel); biases stay f32.
    w1s = w1[:state_dim].astype(jnp.bfloat16)
    w1a = w1[state_dim:].astype(jnp.bfloat16)
    w2b = w2.astype(jnp.bfloat16)

    batch_spec = lambda feat: pl.BlockSpec((tb, feat), lambda i: (i, 0))
    const_spec = lambda shape: pl.BlockSpec(shape, lambda i: (0, 0))

    out = pl.pallas_call(
        critic_dropout_kernel,
        out_shape=jax.ShapeDtypeStruct((batch_p, 1), jnp.float32),
        grid=grid,
        in_specs=[
            batch_spec(state_dim),            # state tile
            batch_spec(action_dim),           # action tile
            const_spec((state_dim, H1)),      # W1[:state_dim]   (VMEM-resident)
            const_spec((action_dim, H1)),     # W1[state_dim:]
            const_spec((1, H1)),              # b1
            const_spec((H1, H2)),             # W2
            const_spec((1, H2)),              # b2
            const_spec((1, H2)),              # W3 (stored transposed: (1, H2))
            const_spec((1, 1)),               # b3
            batch_spec(H1),                   # dropout uniforms, layer 1
            batch_spec(H2),                   # dropout uniforms, layer 2
        ],
        out_specs=pl.BlockSpec((tb, 1), lambda i: (i, 0)),
        compiler_params=pltpu.CompilerParams(
            dimension_semantics=("parallel",),   # megacore sharding on v7x
            vmem_limit_bytes=32 * 1024 * 1024,
        ),
    )(state, action, w1s, w1a, b1, w2b, b2, w3, b3, u1, u2)

    return out[:batch]


def init_params(key, state_dim, action_dim):
    """Deterministic init mimicking nn.Linear's U(-1/sqrt(fan_in), 1/sqrt(fan_in)).

    Weights are stored as [in_features, out_features] (transposed vs. PyTorch) so
    the kernel computes x @ W + b; layer-3's weight is kept as (1, H2) for the
    in-kernel reduce.
    """
    def linear(k, fan_in, fan_out):
        kw, kb = jax.random.split(k)
        bound = 1.0 / jnp.sqrt(fan_in)
        w = jax.random.uniform(kw, (fan_in, fan_out), jnp.float32, -bound, bound)
        b = jax.random.uniform(kb, (1, fan_out), jnp.float32, -bound, bound)
        return w, b

    k1, k2, k3 = jax.random.split(key, 3)
    w1, b1 = linear(k1, state_dim + action_dim, H1)
    w2, b2 = linear(k2, H1, H2)
    w3c, b3 = linear(k3, H2, 1)
    return (w1, b1, w2, b2, w3c.T, b3)       # w3 stored as (1, H2)


if __name__ == "__main__":
    state_dim, action_dim, batch = 16, 8, 8

    key = jax.random.PRNGKey(0)
    kp, ks, ka, kd = jax.random.split(key, 4)
    params = init_params(kp, state_dim, action_dim)
    state = jax.random.normal(ks, (batch, state_dim), jnp.float32)
    action = jax.random.normal(ka, (batch, action_dim), jnp.float32)

    q = critic_dropout_forward(state, action, params, kd)
    jax.block_until_ready(q)

    assert q.shape == (batch, 1)
    assert bool(jnp.all(jnp.isfinite(q)))
    print("KERNEL_OK")
</pallas_src>

<mosaic_0001>
module attributes {stable_mosaic.version = 11 : i64} {
  func.func @critic_dropout_kernel(%arg0: i32, %arg1: memref<8x16xf32, #tpu.memory_space<vmem>>, %arg2: memref<8x8xf32, #tpu.memory_space<vmem>>, %arg3: memref<16x400xbf16, #tpu.memory_space<vmem>>, %arg4: memref<8x400xbf16, #tpu.memory_space<vmem>>, %arg5: memref<1x400xf32, #tpu.memory_space<vmem>>, %arg6: memref<400x300xbf16, #tpu.memory_space<vmem>>, %arg7: memref<1x300xf32, #tpu.memory_space<vmem>>, %arg8: memref<1x300xf32, #tpu.memory_space<vmem>>, %arg9: memref<1x1xf32, #tpu.memory_space<vmem>>, %arg10: memref<8x400xf32, #tpu.memory_space<vmem>>, %arg11: memref<8x300xf32, #tpu.memory_space<vmem>>, %arg12: memref<8x1xf32, #tpu.memory_space<vmem>>) attributes {dimension_semantics = [#tpu.dimension_semantics<parallel>], iteration_bounds = array<i64: 1>, scalar_prefetch = 0 : i64, scratch_operands = 0 : i64, tpu.core_type = #tpu.core_type<tc>, window_params = [{transform_indices = @transform_0, window_bounds = array<i64: 8, 16>}, {transform_indices = @transform_1, window_bounds = array<i64: 8, 8>}, {pipeline_mode = #tpu.pipeline_mode<synchronous>, transform_indices = @transform_2, window_bounds = array<i64: 16, 400>}, {pipeline_mode = #tpu.pipeline_mode<synchronous>, transform_indices = @transform_3, window_bounds = array<i64: 8, 400>}, {pipeline_mode = #tpu.pipeline_mode<synchronous>, transform_indices = @transform_4, window_bounds = array<i64: 1, 400>}, {pipeline_mode = #tpu.pipeline_mode<synchronous>, transform_indices = @transform_5, window_bounds = array<i64: 400, 300>}, {pipeline_mode = #tpu.pipeline_mode<synchronous>, transform_indices = @transform_6, window_bounds = array<i64: 1, 300>}, {pipeline_mode = #tpu.pipeline_mode<synchronous>, transform_indices = @transform_7, window_bounds = array<i64: 1, 300>}, {pipeline_mode = #tpu.pipeline_mode<synchronous>, transform_indices = @transform_8, window_bounds = array<i64: 1, 1>}, {transform_indices = @transform_9, window_bounds = array<i64: 8, 400>}, {transform_indices = @transform_10, window_bounds = array<i64: 8, 300>}, {transform_indices = @transform_11, window_bounds = array<i64: 8, 1>}]} {
    %c0 = arith.constant 0 : index
    %c0_0 = arith.constant 0 : index
    %0 = vector.load %arg1[%c0, %c0_0] : memref<8x16xf32, #tpu.memory_space<vmem>>, vector<8x16xf32>
    %1 = arith.truncf %0 : vector<8x16xf32> to vector<8x16xbf16>
    %c0_1 = arith.constant 0 : index
    %c0_2 = arith.constant 0 : index
    %2 = vector.load %arg3[%c0_1, %c0_2] : memref<16x400xbf16, #tpu.memory_space<vmem>>, vector<16x400xbf16>
    %cst = arith.constant dense<0.000000e+00> : vector<8x400xf32>
    %3 = tpu.matmul %1, %2, %cst {dimension_numbers = #tpu.dot_dimension_numbers<[1], [0], [0], [1], [0, 0, 1, 1], [], []>} : vector<8x16xbf16>, vector<16x400xbf16>, vector<8x400xf32> -> vector<8x400xf32>
    %c0_3 = arith.constant 0 : index
    %c0_4 = arith.constant 0 : index
    %4 = vector.load %arg2[%c0_3, %c0_4] : memref<8x8xf32, #tpu.memory_space<vmem>>, vector<8x8xf32>
    %5 = arith.truncf %4 : vector<8x8xf32> to vector<8x8xbf16>
    %c0_5 = arith.constant 0 : index
    %c0_6 = arith.constant 0 : index
    %6 = vector.load %arg4[%c0_5, %c0_6] : memref<8x400xbf16, #tpu.memory_space<vmem>>, vector<8x400xbf16>
    %cst_7 = arith.constant dense<0.000000e+00> : vector<8x400xf32>
    %7 = tpu.matmul %5, %6, %cst_7 {dimension_numbers = #tpu.dot_dimension_numbers<[1], [0], [0], [1], [0, 0, 1, 1], [], []>} : vector<8x8xbf16>, vector<8x400xbf16>, vector<8x400xf32> -> vector<8x400xf32>
    %8 = arith.addf %3, %7 : vector<8x400xf32>
    %c0_8 = arith.constant 0 : index
    %c0_9 = arith.constant 0 : index
    %9 = vector.load %arg5[%c0_8, %c0_9] : memref<1x400xf32, #tpu.memory_space<vmem>>, vector<1x400xf32>
    %10 = vector.broadcast %9 : vector<1x400xf32> to vector<8x400xf32>
    %11 = arith.addf %8, %10 : vector<8x400xf32>
    %cst_10 = arith.constant 0.000000e+00 : f32
    %12 = vector.broadcast %cst_10 : f32 to vector<8x400xf32>
    %13 = arith.maximumf %11, %12 : vector<8x400xf32>
    %c0_11 = arith.constant 0 : index
    %c0_12 = arith.constant 0 : index
    %14 = vector.load %arg10[%c0_11, %c0_12] : memref<8x400xf32, #tpu.memory_space<vmem>>, vector<8x400xf32>
    %cst_13 = arith.constant 1.000000e-01 : f32
    %15 = vector.broadcast %cst_13 : f32 to vector<8x400xf32>
    %16 = arith.cmpf oge, %14, %15 : vector<8x400xf32>
    %cst_14 = arith.constant 1.11111116 : f32
    %17 = vector.broadcast %cst_14 : f32 to vector<8x400xf32>
    %18 = arith.mulf %13, %17 : vector<8x400xf32>
    %cst_15 = arith.constant 0.000000e+00 : f32
    %19 = vector.broadcast %cst_15 : f32 to vector<8x400xf32>
    %20 = arith.select %16, %18, %19 : vector<8x400xi1>, vector<8x400xf32>
    %21 = arith.truncf %20 : vector<8x400xf32> to vector<8x400xbf16>
    %c0_16 = arith.constant 0 : index
    %c0_17 = arith.constant 0 : index
    %22 = vector.load %arg6[%c0_16, %c0_17] : memref<400x300xbf16, #tpu.memory_space<vmem>>, vector<400x300xbf16>
    %cst_18 = arith.constant dense<0.000000e+00> : vector<8x300xf32>
    %23 = tpu.matmul %21, %22, %cst_18 {dimension_numbers = #tpu.dot_dimension_numbers<[1], [0], [0], [1], [0, 0, 1, 1], [], []>} : vector<8x400xbf16>, vector<400x300xbf16>, vector<8x300xf32> -> vector<8x300xf32>
    %c0_19 = arith.constant 0 : index
    %c0_20 = arith.constant 0 : index
    %24 = vector.load %arg7[%c0_19, %c0_20] : memref<1x300xf32, #tpu.memory_space<vmem>>, vector<1x300xf32>
    %25 = vector.broadcast %24 : vector<1x300xf32> to vector<8x300xf32>
    %26 = arith.addf %23, %25 : vector<8x300xf32>
    %cst_21 = arith.constant 0.000000e+00 : f32
    %27 = vector.broadcast %cst_21 : f32 to vector<8x300xf32>
    %28 = arith.maximumf %26, %27 : vector<8x300xf32>
    %c0_22 = arith.constant 0 : index
    %c0_23 = arith.constant 0 : index
    %29 = vector.load %arg11[%c0_22, %c0_23] : memref<8x300xf32, #tpu.memory_space<vmem>>, vector<8x300xf32>
    %cst_24 = arith.constant 1.000000e-01 : f32
    %30 = vector.broadcast %cst_24 : f32 to vector<8x300xf32>
    %31 = arith.cmpf oge, %29, %30 : vector<8x300xf32>
    %cst_25 = arith.constant 1.11111116 : f32
    %32 = vector.broadcast %cst_25 : f32 to vector<8x300xf32>
    %33 = arith.mulf %28, %32 : vector<8x300xf32>
    %cst_26 = arith.constant 0.000000e+00 : f32
    %34 = vector.broadcast %cst_26 : f32 to vector<8x300xf32>
    %35 = arith.select %31, %33, %34 : vector<8x300xi1>, vector<8x300xf32>
    %c0_27 = arith.constant 0 : index
    %c0_28 = arith.constant 0 : index
    %36 = vector.load %arg8[%c0_27, %c0_28] : memref<1x300xf32, #tpu.memory_space<vmem>>, vector<1x300xf32>
    %37 = vector.broadcast %36 : vector<1x300xf32> to vector<8x300xf32>
    %38 = arith.mulf %35, %37 : vector<8x300xf32>
    %cst_29 = arith.constant dense<0.000000e+00> : vector<8xf32>
    %39 = vector.multi_reduction <add>, %38, %cst_29 [1] : vector<8x300xf32> to vector<8xf32>
    %40 = vector.shape_cast %39 : vector<8xf32> to vector<8x1xf32>
    %c0_30 = arith.constant 0 : index
    %c0_31 = arith.constant 0 : index
    %41 = vector.load %arg9[%c0_30, %c0_31] : memref<1x1xf32, #tpu.memory_space<vmem>>, vector<1x1xf32>
    %42 = vector.broadcast %41 : vector<1x1xf32> to vector<8x1xf32>
    %43 = arith.addf %40, %42 : vector<8x1xf32>
    %c0_32 = arith.constant 0 : index
    %c0_33 = arith.constant 0 : index
    %44 = vector.load %arg12[%c0_32, %c0_33] : memref<8x1xf32, #tpu.memory_space<vmem>>, vector<8x1xf32>
    tpu.vector_store %arg12[%c0_32, %c0_33], %43 {strides = array<i32>} : memref<8x1xf32, #tpu.memory_space<vmem>>, vector<8x1xf32>,
    return
  }
  func.func @transform_0(%arg0: i32) -> (i32, i32) {
    %c0_i32 = arith.constant 0 : i32
    %c0_i32_0 = arith.constant 0 : i32
    return %arg0, %c0_i32 : i32, i32
  }
  func.func @transform_1(%arg0: i32) -> (i32, i32) {
    %c0_i32 = arith.constant 0 : i32
    %c0_i32_0 = arith.constant 0 : i32
    return %arg0, %c0_i32 : i32, i32
  }
  func.func @transform_2(%arg0: i32) -> (i32, i32) {
    %c0_i32 = arith.constant 0 : i32
    %c0_i32_0 = arith.constant 0 : i32
    %c0_i32_1 = arith.constant 0 : i32
    return %c0_i32, %c0_i32_0 : i32, i32
  }
  func.func @transform_3(%arg0: i32) -> (i32, i32) {
    %c0_i32 = arith.constant 0 : i32
    %c0_i32_0 = arith.constant 0 : i32
    %c0_i32_1 = arith.constant 0 : i32
    return %c0_i32, %c0_i32_0 : i32, i32
  }
  func.func @transform_4(%arg0: i32) -> (i32, i32) {
    %c0_i32 = arith.constant 0 : i32
    %c0_i32_0 = arith.constant 0 : i32
    %c0_i32_1 = arith.constant 0 : i32
    return %c0_i32, %c0_i32_0 : i32, i32
  }
  func.func @transform_5(%arg0: i32) -> (i32, i32) {
    %c0_i32 = arith.constant 0 : i32
    %c0_i32_0 = arith.constant 0 : i32
    %c0_i32_1 = arith.constant 0 : i32
    return %c0_i32, %c0_i32_0 : i32, i32
  }
  func.func @transform_6(%arg0: i32) -> (i32, i32) {
    %c0_i32 = arith.constant 0 : i32
    %c0_i32_0 = arith.constant 0 : i32
    %c0_i32_1 = arith.constant 0 : i32
    return %c0_i32, %c0_i32_0 : i32, i32
  }
  func.func @transform_7(%arg0: i32) -> (i32, i32) {
    %c0_i32 = arith.constant 0 : i32
    %c0_i32_0 = arith.constant 0 : i32
    %c0_i32_1 = arith.constant 0 : i32
    return %c0_i32, %c0_i32_0 : i32, i32
  }
  func.func @transform_8(%arg0: i32) -> (i32, i32) {
    %c0_i32 = arith.constant 0 : i32
    %c0_i32_0 = arith.constant 0 : i32
    %c0_i32_1 = arith.constant 0 : i32
    return %c0_i32, %c0_i32_0 : i32, i32
  }
  func.func @transform_9(%arg0: i32) -> (i32, i32) {
    %c0_i32 = arith.constant 0 : i32
    %c0_i32_0 = arith.constant 0 : i32
    return %arg0, %c0_i32 : i32, i32
  }
  func.func @transform_10(%arg0: i32) -> (i32, i32) {
    %c0_i32 = arith.constant 0 : i32
    %c0_i32_0 = arith.constant 0 : i32
    return %arg0, %c0_i32 : i32, i32
  }
  func.func @transform_11(%arg0: i32) -> (i32, i32) {
    %c0_i32 = arith.constant 0 : i32
    %c0_i32_0 = arith.constant 0 : i32
    return %arg0, %c0_i32 : i32, i32
  }
}

</mosaic_0001>

<llo_original>
// kernel: critic_dropout_forward.3
$region0: #{critic_dropout_forward.3}
  #allocation0 [shape = 'u32[]', space=smem, size = 0x4, offset = 0x4, fixed_abs, tag = 'smem constant byte address 0x4 - core index']
  #allocation1 [shape = 'u32[144,128]{1,0:T(1,128)}', space=vmem, size = 0x12000, scoped, tag = 'internal scratch']
  #allocation2 [shape = 'f32[1,1]{1,0:T(1,128)S(1)}', space=vmem, size = 0x200, scoped, tag = 'scoped memory for critic_dropout_forward.3']
  %s0 = inlined_call_operand.vmem [shape: f32[8,16], index: 0, kind: input, shape index: {}]
  %s1 = inlined_call_operand.vmem [shape: f32[8,8], index: 1, kind: input, shape index: {}]
  %s2 = inlined_call_operand.vmem [shape: bf16[16,400], index: 2, kind: input, shape index: {}]
  %s3 = inlined_call_operand.vmem [shape: bf16[8,400], index: 3, kind: input, shape index: {}]
  %s4 = inlined_call_operand.vmem [shape: f32[1,400], index: 4, kind: input, shape index: {}]
  %s5 = inlined_call_operand.vmem [shape: bf16[400,300], index: 5, kind: input, shape index: {}]
  %s6 = inlined_call_operand.vmem [shape: f32[1,300], index: 6, kind: input, shape index: {}]
  %s7 = inlined_call_operand.vmem [shape: f32[1,300], index: 7, kind: input, shape index: {}]
  %s8 = inlined_call_operand.<no memory space> [shape: f32[1,1], index: 8, kind: input, shape index: {}]
  %s9 = inlined_call_operand.vmem [shape: f32[8,400], index: 9, kind: input, shape index: {}]
  %s10 = inlined_call_operand.vmem [shape: f32[8,300], index: 10, kind: input, shape index: {}]
  %s11 = inlined_call_operand.vmem [shape: f32[8,1], index: 11, kind: output, shape index: {}]
  %s12 = sld [smem:[#allocation0]]
  $region54: #{critic_dropout_forward.3} parent=0
    _
  %s14 = ssub.s32 1, %s12
  %s15 = scalar_select 0, %s14, %s12
  %v16 = vstv %s8
  %17 = vst [vmem:[#allocation2] sm:$0x1] %v16
  // Predicated region
  $region2: #{critic_dropout_forward.3} parent=0 // pred_check
    _
  $region3: #{critic_dropout_forward.3} parent=0 // pred_check_branch
    %19 = sbr.rel (0) target = $region5
  $region4: #{critic_dropout_forward.3} parent=0 // pred_region
    _
  $region5: #{critic_dropout_forward.3} parent=0 // pred_fallthru
    _
  // Predicated region
  $region6: #{critic_dropout_forward.3} parent=0 // pred_check
    _
  $region7: #{critic_dropout_forward.3} parent=0 // pred_check_branch
    %21 = sbr.rel (0) target = $region9
  $region8: #{critic_dropout_forward.3} parent=0 // pred_region
    _
  $region9: #{critic_dropout_forward.3} parent=0 // pred_fallthru
    _
  // Predicated region
  $region10: #{critic_dropout_forward.3} parent=0 // pred_check
    _
  $region11: #{critic_dropout_forward.3} parent=0 // pred_check_branch
    %23 = sbr.rel (0) target = $region13
  $region12: #{critic_dropout_forward.3} parent=0 // pred_region
    _
  $region13: #{critic_dropout_forward.3} parent=0 // pred_fallthru
    _
  // Predicated region
  $region14: #{critic_dropout_forward.3} parent=0 // pred_check
    _
  $region15: #{critic_dropout_forward.3} parent=0 // pred_check_branch
    %25 = sbr.rel (0) target = $region17
  $region16: #{critic_dropout_forward.3} parent=0 // pred_region
    _
  $region17: #{critic_dropout_forward.3} parent=0 // pred_fallthru
    _
  // Predicated region
  $region18: #{critic_dropout_forward.3} parent=0 // pred_check
    _
  $region19: #{critic_dropout_forward.3} parent=0 // pred_check_branch
    %27 = sbr.rel (0) target = $region21
  $region20: #{critic_dropout_forward.3} parent=0 // pred_region
    _
  $region21: #{critic_dropout_forward.3} parent=0 // pred_fallthru
    _
  // Predicated region
  $region22: #{critic_dropout_forward.3} parent=0 // pred_check
    _
  $region23: #{critic_dropout_forward.3} parent=0 // pred_check_branch
    %29 = sbr.rel (0) target = $region25
  $region24: #{critic_dropout_forward.3} parent=0 // pred_region
    _
  $region25: #{critic_dropout_forward.3} parent=0 // pred_fallthru
    _
  // Predicated region
  $region26: #{critic_dropout_forward.3} parent=0 // pred_check
    _
  $region27: #{critic_dropout_forward.3} parent=0 // pred_check_branch
    %31 = sbr.rel (0) target = $region29
  $region28: #{critic_dropout_forward.3} parent=0 // pred_region
    _
  $region29: #{critic_dropout_forward.3} parent=0 // pred_fallthru
    _
  // Predicated region
  $region30: #{critic_dropout_forward.3} parent=0 // pred_check
    _
  $region31: #{critic_dropout_forward.3} parent=0 // pred_check_branch
    %33 = sbr.rel (0) target = $region33
  $region32: #{critic_dropout_forward.3} parent=0 // pred_region
    _
  $region33: #{critic_dropout_forward.3} parent=0 // pred_fallthru
    _
  // Predicated region
  $region34: #{critic_dropout_forward.3} parent=0 // pred_check
    _
  $region35: #{critic_dropout_forward.3} parent=0 // pred_check_branch
    %35 = sbr.rel (0) target = $region37
  $region36: #{critic_dropout_forward.3} parent=0 // pred_region
    _
  $region37: #{critic_dropout_forward.3} parent=0 // pred_fallthru
    _
  // Predicated region
  $region38: #{critic_dropout_forward.3} parent=0 // pred_check
    _
  $region39: #{critic_dropout_forward.3} parent=0 // pred_check_branch
    %37 = sbr.rel (0) target = $region41
  $region40: #{critic_dropout_forward.3} parent=0 // pred_region
    _
  $region41: #{critic_dropout_forward.3} parent=0 // pred_fallthru
    _
  // Predicated region
  $region42: #{critic_dropout_forward.3} parent=0 // pred_check
    _
  $region43: #{critic_dropout_forward.3} parent=0 // pred_check_branch
    %39 = sbr.rel (0) target = $region45
  $region44: #{critic_dropout_forward.3} parent=0 // pred_region
    _
  $region45: #{critic_dropout_forward.3} parent=0 // pred_fallthru
    _
  %v41 = vld [vmem:[%s0] sm:$0xff]
  %v42 = vpack.c.bf16 %v41, %v41
  %v43 = vld [vmem:[%s2] sm:$0xff]
  %v44 = vld [vmem:[%s2 + $0x8] sm:$0xff]
  %v45 = vld [vmem:[%s2 + $0x10] sm:$0xff]
  %v46 = vld [vmem:[%s2 + $0x18] sm:$0xff]
  %v47 = vld [vmem:[%s1] sm:$0xff]
  %v48 = vpack.c.bf16 %v47, %v47
  %v49 = vld [vmem:[%s3] sm:$0xff]
  %v50 = vld [vmem:[%s3 + $0x8] sm:$0xff]
  %v53 = vunpack.c.l.b16 %v49
  %v54 = vunpack.c.h.b16 %v49
  %v55 = vunpack.c.l.b16 %v50
  %v56 = vunpack.c.h.b16 %v50
  %v57 = vpack.c.b16 %v53, %v53
  %v58 = vpack.c.b16 %v54, %v54
  %v59 = vpack.c.b16 %v55, %v55
  %v60 = vpack.c.b16 %v56, %v56
  %vm61 = vcmask 64512
  %v63 = vsel %vm61, %v48, 0
  %vm65 = vcmask 1043456
  %v67 = vsel %vm65, %v57, 0
  %v70 = vsel %vm65, %v58, 0
  %v73 = vsel %vm65, %v59, 0
  %v76 = vsel %vm65, %v60, 0
  %78 = vmatprep.subr.bf16.mxu0 %v70
  %79 = vmatpush1.bf16.msra.mxu0 %v67
  %80 = vmatprep.subr.bf16.mxu0 0
  %81 = vmatpush1.bf16.msra.mxu0 0
  %82 = vmatprep.subr.bf16.mxu0 0
  %83 = vmatpush1.bf16.msra.mxu0 0
  %84 = vmatprep.subr.bf16.mxu0 0
  %85 = vmatpush1.bf16.msra.mxu0 0
  %86 = vmatprep.subr.bf16.mxu0 0
  %87 = vmatpush1.bf16.msra.mxu0 0
  %88 = vmatprep.subr.bf16.mxu0 0
  %89 = vmatpush1.bf16.msra.mxu0 0
  %90 = vmatprep.subr.bf16.mxu0 0
  %91 = vmatpush1.bf16.msra.mxu0 0
  %92 = vmatprep.subr.bf16.mxu0 0
  %93 = vmatpush1.bf16.msra.mxu0 0
  %94 = vmatprep.subr.bf16.mxu0 0
  %95 = vmatpush1.bf16.msra.mxu0 0
  %96 = vmatprep.subr.bf16.mxu0 0
  %97 = vmatpush1.bf16.msra.mxu0 0
  %98 = vmatprep.subr.bf16.mxu0 0
  %99 = vmatpush1.bf16.msra.mxu0 0
  %100 = vmatprep.subr.bf16.mxu0 0
  %101 = vmatpush1.bf16.msra.mxu0 0
  %102 = vmatprep.subr.bf16.mxu0 0
  %103 = vmatpush1.bf16.msra.mxu0 0
  %104 = vmatprep.subr.bf16.mxu0 0
  %105 = vmatpush1.bf16.msra.mxu0 0
  %106 = vmatprep.subr.bf16.mxu0 0
  %107 = vmatpush1.bf16.msra.mxu0 0
  %108 = vmatprep.subr.bf16.mxu0 0
  %109 = vmatpush1.bf16.msra.mxu0 0
  %110 = vmatprep.mubr.bf16.mxu0 0
  %111 = vmatmul.mubr.bf16.gmra.mrb[0].mxu0 %v63
  %v112 = vpop.f32.mrb[0].mxu0
  %v113 = vadd.f32 0.0, %v112
  %v114 = vpop.f32.mrb[0].mxu0
  %v115 = vadd.f32 0.0, %v114
  %v116 = vpop.f32.mrb[0].mxu0
  %v117 = vpop.f32.mrb[0].mxu0
  %118 = vdwg.mxu0
  %119 = vmatprep.subr.bf16.mxu0 %v76
  %120 = vmatpush1.bf16.msra.mxu0 %v73
  %121 = vmatprep.subr.bf16.mxu0 0
  %122 = vmatpush1.bf16.msra.mxu0 0
  %123 = vmatprep.subr.bf16.mxu0 0
  %124 = vmatpush1.bf16.msra.mxu0 0
  %125 = vmatprep.subr.bf16.mxu0 0
  %126 = vmatpush1.bf16.msra.mxu0 0
  %127 = vmatprep.subr.bf16.mxu0 0
  %128 = vmatpush1.bf16.msra.mxu0 0
  %129 = vmatprep.subr.bf16.mxu0 0
  %130 = vmatpush1.bf16.msra.mxu0 0
  %131 = vmatprep.subr.bf16.mxu0 0
  %132 = vmatpush1.bf16.msra.mxu0 0
  %133 = vmatprep.subr.bf16.mxu0 0
  %134 = vmatpush1.bf16.msra.mxu0 0
  %135 = vmatprep.subr.bf16.mxu0 0
  %136 = vmatpush1.bf16.msra.mxu0 0
  %137 = vmatprep.subr.bf16.mxu0 0
  %138 = vmatpush1.bf16.msra.mxu0 0
  %139 = vmatprep.subr.bf16.mxu0 0
  %140 = vmatpush1.bf16.msra.mxu0 0
  %141 = vmatprep.subr.bf16.mxu0 0
  %142 = vmatpush1.bf16.msra.mxu0 0
  %143 = vmatprep.subr.bf16.mxu0 0
  %144 = vmatpush1.bf16.msra.mxu0 0
  %145 = vmatprep.subr.bf16.mxu0 0
  %146 = vmatpush1.bf16.msra.mxu0 0
  %147 = vmatprep.subr.bf16.mxu0 0
  %148 = vmatpush1.bf16.msra.mxu0 0
  %149 = vmatprep.subr.bf16.mxu0 0
  %150 = vmatpush1.bf16.msra.mxu0 0
  %151 = vmatprep.mubr.bf16.mxu0 0
  %152 = vmatmul.mubr.bf16.gmra.mrb[0].mxu0 %v63
  %v153 = vpop.f32.mrb[0].mxu0
  %v154 = vadd.f32 0.0, %v153
  %v155 = vpop.f32.mrb[0].mxu0
  %v156 = vadd.f32 0.0, %v155
  %v157 = vpop.f32.mrb[0].mxu0
  %v158 = vpop.f32.mrb[0].mxu0
  %159 = vdwg.mxu0
  %v164 = vunpack.c.l.b16 %v43
  %v165 = vunpack.c.h.b16 %v43
  %v166 = vunpack.c.l.b16 %v44
  %v167 = vunpack.c.h.b16 %v44
  %v168 = vunpack.c.l.b16 %v45
  %v169 = vunpack.c.h.b16 %v45
  %v170 = vunpack.c.l.b16 %v46
  %v171 = vunpack.c.h.b16 %v46
  %v172 = vpack.c.b16 %v168, %v164
  %v173 = vpack.c.b16 %v169, %v165
  %v174 = vpack.c.b16 %v170, %v166
  %v175 = vpack.c.b16 %v171, %v167
  %vm180 = vcmask 130048
  %v182 = vsel %vm180, %v42, 0
  %184 = vmatprep.subr.bf16.mxu0 %v173
  %185 = vmatpush1.bf16.msra.mxu0 %v172
  %186 = vmatprep.subr.bf16.mxu0 0
  %187 = vmatpush1.bf16.msra.mxu0 0
  %188 = vmatprep.subr.bf16.mxu0 0
  %189 = vmatpush1.bf16.msra.mxu0 0
  %190 = vmatprep.subr.bf16.mxu0 0
  %191 = vmatpush1.bf16.msra.mxu0 0
  %192 = vmatprep.subr.bf16.mxu0 0
  %193 = vmatpush1.bf16.msra.mxu0 0
  %194 = vmatprep.subr.bf16.mxu0 0
  %195 = vmatpush1.bf16.msra.mxu0 0
  %196 = vmatprep.subr.bf16.mxu0 0
  %197 = vmatpush1.bf16.msra.mxu0 0
  %198 = vmatprep.subr.bf16.mxu0 0
  %199 = vmatpush1.bf16.msra.mxu0 0
  %200 = vmatprep.subr.bf16.mxu0 0
  %201 = vmatpush1.bf16.msra.mxu0 0
  %202 = vmatprep.subr.bf16.mxu0 0
  %203 = vmatpush1.bf16.msra.mxu0 0
  %204 = vmatprep.subr.bf16.mxu0 0
  %205 = vmatpush1.bf16.msra.mxu0 0
  %206 = vmatprep.subr.bf16.mxu0 0
  %207 = vmatpush1.bf16.msra.mxu0 0
  %208 = vmatprep.subr.bf16.mxu0 0
  %209 = vmatpush1.bf16.msra.mxu0 0
  %210 = vmatprep.subr.bf16.mxu0 0
  %211 = vmatpush1.bf16.msra.mxu0 0
  %212 = vmatprep.subr.bf16.mxu0 0
  %213 = vmatpush1.bf16.msra.mxu0 0
  %214 = vmatprep.subr.bf16.mxu0 0
  %215 = vmatpush1.bf16.msra.mxu0 0
  %216 = vmatprep.mubr.bf16.mxu0 0
  %217 = vmatmul.mubr.bf16.gmra.mrb[0].mxu0 %v182
  %v218 = vpop.f32.mrb[0].mxu0
  %v219 = vadd.f32 %v113, %v218
  %v220 = vpop.f32.mrb[0].mxu0
  %v221 = vadd.f32 %v115, %v220
  %v222 = vpop.f32.mrb[0].mxu0
  %v223 = vpop.f32.mrb[0].mxu0
  %224 = vdwg.mxu0
  %225 = vmatprep.subr.bf16.mxu0 %v175
  %226 = vmatpush1.bf16.msra.mxu0 %v174
  %227 = vmatprep.subr.bf16.mxu0 0
  %228 = vmatpush1.bf16.msra.mxu0 0
  %229 = vmatprep.subr.bf16.mxu0 0
  %230 = vmatpush1.bf16.msra.mxu0 0
  %231 = vmatprep.subr.bf16.mxu0 0
  %232 = vmatpush1.bf16.msra.mxu0 0
  %233 = vmatprep.subr.bf16.mxu0 0
  %234 = vmatpush1.bf16.msra.mxu0 0
  %235 = vmatprep.subr.bf16.mxu0 0
  %236 = vmatpush1.bf16.msra.mxu0 0
  %237 = vmatprep.subr.bf16.mxu0 0
  %238 = vmatpush1.bf16.msra.mxu0 0
  %239 = vmatprep.subr.bf16.mxu0 0
  %240 = vmatpush1.bf16.msra.mxu0 0
  %241 = vmatprep.subr.bf16.mxu0 0
  %242 = vmatpush1.bf16.msra.mxu0 0
  %243 = vmatprep.subr.bf16.mxu0 0
  %244 = vmatpush1.bf16.msra.mxu0 0
  %245 = vmatprep.subr.bf16.mxu0 0
  %246 = vmatpush1.bf16.msra.mxu0 0
  %247 = vmatprep.subr.bf16.mxu0 0
  %248 = vmatpush1.bf16.msra.mxu0 0
  %249 = vmatprep.subr.bf16.mxu0 0
  %250 = vmatpush1.bf16.msra.mxu0 0
  %251 = vmatprep.subr.bf16.mxu0 0
  %252 = vmatpush1.bf16.msra.mxu0 0
  %253 = vmatprep.subr.bf16.mxu0 0
  %254 = vmatpush1.bf16.msra.mxu0 0
  %255 = vmatprep.subr.bf16.mxu0 0
  %256 = vmatpush1.bf16.msra.mxu0 0
  %257 = vmatprep.mubr.bf16.mxu0 0
  %258 = vmatmul.mubr.bf16.gmra.mrb[0].mxu0 %v182
  %v259 = vpop.f32.mrb[0].mxu0
  %v260 = vadd.f32 %v154, %v259
  %v261 = vpop.f32.mrb[0].mxu0
  %v262 = vadd.f32 %v156, %v261
  %v263 = vpop.f32.mrb[0].mxu0
  %v264 = vpop.f32.mrb[0].mxu0
  %265 = vdwg.mxu0
  %v266 = vld [vmem:[%s4] sm:$0xf]
  %v268 = vlaneseq
  %v269 = vshrl.u32 %v268, 7
  %v270 = vsub.s32 0, %v269
  %v271 = vrot.slane %v266, %v270
  %v272 = vlaneseq
  %v273 = vshrl.u32 %v272, 7
  %v274 = vsub.s32 1, %v273
  %v275 = vrot.slane %v266, %v274
  %v276 = vlaneseq
  %v277 = vshrl.u32 %v276, 7
  %v278 = vsub.s32 2, %v277
  %v279 = vrot.slane %v266, %v278
  %v280 = vlaneseq
  %v281 = vshrl.u32 %v280, 7
  %v282 = vsub.s32 3, %v281
  %v283 = vrot.slane %v266, %v282
  %v288 = vadd.f32 %v219, %v271
  %v289 = vadd.f32 %v221, %v275
  %v290 = vadd.f32 %v260, %v279
  %v291 = vadd.f32 %v262, %v283
  %v292 = vmax.f32 %v288, 0.0
  %v293 = vmax.f32 %v289, 0.0
  %v294 = vmax.f32 %v290, 0.0
  %v295 = vmax.f32 %v291, 0.0
  %v296 = vld [vmem:[%s9] sm:$0xff]
  %v297 = vld [vmem:[%s9 + $0x8] sm:$0xff]
  %v298 = vld [vmem:[%s9 + $0x10] sm:$0xff]
  %v299 = vld [vmem:[%s9 + $0x18] sm:$0xff]
  %vm300 = vcmp.ge.f32.partialorder %v296, 0.1
  %vm301 = vcmp.ge.f32.partialorder %v297, 0.1
  %vm302 = vcmp.ge.f32.partialorder %v298, 0.1
  %vm303 = vcmp.ge.f32.partialorder %v299, 0.1
  %v304 = vmul.f32 %v292, 1.1111112
  %v305 = vmul.f32 %v293, 1.1111112
  %v306 = vmul.f32 %v294, 1.1111112
  %v307 = vmul.f32 %v295, 1.1111112
  %v308 = vsel %vm300, %v304, 0.0
  %v309 = vsel %vm301, %v305, 0.0
  %v310 = vsel %vm302, %v306, 0.0
  %v311 = vsel %vm303, %v307, 0.0
  %v312 = vpack.c.bf16 %v308, %v308
  %v313 = vpack.c.bf16 %v309, %v309
  %v314 = vpack.c.bf16 %v310, %v310
  %v315 = vpack.c.bf16 %v311, %v311
  %v316 = vld [vmem:[%s5] sm:$0xff]
  %v317 = vld [vmem:[%s5 + $0x8] sm:$0xf]
  %v318 = vld [vmem:[%s5 + $0xc] sm:$0xff]
  %v319 = vld [vmem:[%s5 + $0x14] sm:$0xf]
  %v320 = vld [vmem:[%s5 + $0x18] sm:$0xff]
  %v321 = vld [vmem:[%s5 + $0x20] sm:$0xf]
  %v322 = vld [vmem:[%s5 + $0x24] sm:$0xff]
  %v323 = vld [vmem:[%s5 + $0x2c] sm:$0xf]
  %v324 = vld [vmem:[%s5 + $0x30] sm:$0xff]
  %v325 = vld [vmem:[%s5 + $0x38] sm:$0xf]
  %v326 = vld [vmem:[%s5 + $0x3c] sm:$0xff]
  %v327 = vld [vmem:[%s5 + $0x44] sm:$0xf]
  %v328 = vld [vmem:[%s5 + $0x48] sm:$0xff]
  %v329 = vld [vmem:[%s5 + $0x50] sm:$0xf]
  %v330 = vld [vmem:[%s5 + $0x54] sm:$0xff]
  %v331 = vld [vmem:[%s5 + $0x5c] sm:$0xf]
  %v332 = vld [vmem:[%s5 + $0x60] sm:$0xff]
  %v333 = vld [vmem:[%s5 + $0x68] sm:$0xf]
  %v334 = vld [vmem:[%s5 + $0x6c] sm:$0xff]
  %v335 = vld [vmem:[%s5 + $0x74] sm:$0xf]
  %v336 = vld [vmem:[%s5 + $0x78] sm:$0xff]
  %v337 = vld [vmem:[%s5 + $0x80] sm:$0xf]
  %v338 = vld [vmem:[%s5 + $0x84] sm:$0xff]
  %v339 = vld [vmem:[%s5 + $0x8c] sm:$0xf]
  %v340 = vld [vmem:[%s5 + $0x90] sm:$0xff]
  %v341 = vld [vmem:[%s5 + $0x98] sm:$0xf]
  %v342 = vld [vmem:[%s5 + $0x9c] sm:$0xff]
  %v343 = vld [vmem:[%s5 + $0xa4] sm:$0xf]
  %v344 = vld [vmem:[%s5 + $0xa8] sm:$0xff]
  %v345 = vld [vmem:[%s5 + $0xb0] sm:$0xf]
  %v346 = vld [vmem:[%s5 + $0xb4] sm:$0xff]
  %v347 = vld [vmem:[%s5 + $0xbc] sm:$0xf]
  %v348 = vld [vmem:[%s5 + $0xc0] sm:$0xff]
  %v349 = vld [vmem:[%s5 + $0xc8] sm:$0xf]
  %v350 = vld [vmem:[%s5 + $0xcc] sm:$0xff]
  %v351 = vld [vmem:[%s5 + $0xd4] sm:$0xf]
  %v352 = vld [vmem:[%s5 + $0xd8] sm:$0xff]
  %v353 = vld [vmem:[%s5 + $0xe0] sm:$0xf]
  %v354 = vld [vmem:[%s5 + $0xe4] sm:$0xff]
  %v355 = vld [vmem:[%s5 + $0xec] sm:$0xf]
  %v356 = vld [vmem:[%s5 + $0xf0] sm:$0xff]
  %v357 = vld [vmem:[%s5 + $0xf8] sm:$0xf]
  %v358 = vld [vmem:[%s5 + $0xfc] sm:$0xff]
  %v359 = vld [vmem:[%s5 + $0x104] sm:$0xf]
  %v360 = vld [vmem:[%s5 + $0x108] sm:$0xff]
  %v361 = vld [vmem:[%s5 + $0x110] sm:$0xf]
  %v362 = vld [vmem:[%s5 + $0x114] sm:$0xff]
  %v363 = vld [vmem:[%s5 + $0x11c] sm:$0xf]
  %v364 = vld [vmem:[%s5 + $0x120] sm:$0xff]
  %v365 = vld [vmem:[%s5 + $0x128] sm:$0xf]
  %v366 = vld [vmem:[%s5 + $0x12c] sm:$0xff]
  %v367 = vld [vmem:[%s5 + $0x134] sm:$0xf]
  %v368 = vld [vmem:[%s5 + $0x138] sm:$0xff]
  %v369 = vld [vmem:[%s5 + $0x140] sm:$0xf]
  %v370 = vld [vmem:[%s5 + $0x144] sm:$0xff]
  %v371 = vld [vmem:[%s5 + $0x14c] sm:$0xf]
  %v372 = vld [vmem:[%s5 + $0x150] sm:$0xff]
  %v373 = vld [vmem:[%s5 + $0x158] sm:$0xf]
  %v374 = vld [vmem:[%s5 + $0x15c] sm:$0xff]
  %v375 = vld [vmem:[%s5 + $0x164] sm:$0xf]
  %v376 = vld [vmem:[%s5 + $0x168] sm:$0xff]
  %v377 = vld [vmem:[%s5 + $0x170] sm:$0xf]
  %v378 = vld [vmem:[%s5 + $0x174] sm:$0xff]
  %v379 = vld [vmem:[%s5 + $0x17c] sm:$0xf]
  %v380 = vld [vmem:[%s5 + $0x180] sm:$0xff]
  %v381 = vld [vmem:[%s5 + $0x188] sm:$0xf]
  %v382 = vld [vmem:[%s5 + $0x18c] sm:$0xff]
  %v383 = vld [vmem:[%s5 + $0x194] sm:$0xf]
  %v384 = vld [vmem:[%s5 + $0x198] sm:$0xff]
  %v385 = vld [vmem:[%s5 + $0x1a0] sm:$0xf]
  %v386 = vld [vmem:[%s5 + $0x1a4] sm:$0xff]
  %v387 = vld [vmem:[%s5 + $0x1ac] sm:$0xf]
  %v388 = vld [vmem:[%s5 + $0x1b0] sm:$0xff]
  %v389 = vld [vmem:[%s5 + $0x1b8] sm:$0xf]
  %v390 = vld [vmem:[%s5 + $0x1bc] sm:$0xff]
  %v391 = vld [vmem:[%s5 + $0x1c4] sm:$0xf]
  %v392 = vld [vmem:[%s5 + $0x1c8] sm:$0xff]
  %v393 = vld [vmem:[%s5 + $0x1d0] sm:$0xf]
  %v394 = vld [vmem:[%s5 + $0x1d4] sm:$0xff]
  %v395 = vld [vmem:[%s5 + $0x1dc] sm:$0xf]
  %v396 = vld [vmem:[%s5 + $0x1e0] sm:$0xff]
  %v397 = vld [vmem:[%s5 + $0x1e8] sm:$0xf]
  %v398 = vld [vmem:[%s5 + $0x1ec] sm:$0xff]
  %v399 = vld [vmem:[%s5 + $0x1f4] sm:$0xf]
  %v400 = vld [vmem:[%s5 + $0x1f8] sm:$0xff]
  %v401 = vld [vmem:[%s5 + $0x200] sm:$0xf]
  %v402 = vld [vmem:[%s5 + $0x204] sm:$0xff]
  %v403 = vld [vmem:[%s5 + $0x20c] sm:$0xf]
  %v404 = vld [vmem:[%s5 + $0x210] sm:$0xff]
  %v405 = vld [vmem:[%s5 + $0x218] sm:$0xf]
  %v406 = vld [vmem:[%s5 + $0x21c] sm:$0xff]
  %v407 = vld [vmem:[%s5 + $0x224] sm:$0xf]
  %v408 = vld [vmem:[%s5 + $0x228] sm:$0xff]
  %v409 = vld [vmem:[%s5 + $0x230] sm:$0xf]
  %v410 = vld [vmem:[%s5 + $0x234] sm:$0xff]
  %v411 = vld [vmem:[%s5 + $0x23c] sm:$0xf]
  %v412 = vld [vmem:[%s5 + $0x240] sm:$0xff]
  %v413 = vld [vmem:[%s5 + $0x248] sm:$0xf]
  %v414 = vld [vmem:[%s5 + $0x24c] sm:$0xff]
  %v415 = vld [vmem:[%s5 + $0x254] sm:$0xf]
  %v416 = vld [vmem:[%s6] sm:$0x7]
  %v418 = vlaneseq
  %v419 = vshrl.u32 %v418, 7
  %v420 = vsub.s32 0, %v419
  %v421 = vrot.slane %v416, %v420
  %v422 = vlaneseq
  %v423 = vshrl.u32 %v422, 7
  %v424 = vsub.s32 1, %v423
  %v425 = vrot.slane %v416, %v424
  %v426 = vlaneseq
  %v427 = vshrl.u32 %v426, 7
  %v428 = vsub.s32 2, %v427
  %v429 = vrot.slane %v416, %v428
  %v533 = vunpack.c.l.b16 %v316
  %v534 = vunpack.c.h.b16 %v316
  %v535 = vunpack.c.l.b16 %v317
  %v536 = vunpack.c.l.b16 %v318
  %v537 = vunpack.c.h.b16 %v318
  %v538 = vunpack.c.l.b16 %v319
  %v539 = vunpack.c.l.b16 %v320
  %v540 = vunpack.c.h.b16 %v320
  %v541 = vunpack.c.l.b16 %v321
  %v542 = vunpack.c.l.b16 %v322
  %v543 = vunpack.c.h.b16 %v322
  %v544 = vunpack.c.l.b16 %v323
  %v545 = vunpack.c.l.b16 %v324
  %v546 = vunpack.c.h.b16 %v324
  %v547 = vunpack.c.l.b16 %v325
  %v548 = vunpack.c.l.b16 %v326
  %v549 = vunpack.c.h.b16 %v326
  %v550 = vunpack.c.l.b16 %v327
  %v551 = vunpack.c.l.b16 %v328
  %v552 = vunpack.c.h.b16 %v328
  %v553 = vunpack.c.l.b16 %v329
  %v554 = vunpack.c.l.b16 %v330
  %v555 = vunpack.c.h.b16 %v330
  %v556 = vunpack.c.l.b16 %v331
  %v557 = vunpack.c.l.b16 %v332
  %v558 = vunpack.c.h.b16 %v332
  %v559 = vunpack.c.l.b16 %v333
  %v560 = vunpack.c.l.b16 %v334
  %v561 = vunpack.c.h.b16 %v334
  %v562 = vunpack.c.l.b16 %v335
  %v563 = vunpack.c.l.b16 %v336
  %v564 = vunpack.c.h.b16 %v336
  %v565 = vunpack.c.l.b16 %v337
  %v566 = vunpack.c.l.b16 %v338
  %v567 = vunpack.c.h.b16 %v338
  %v568 = vunpack.c.l.b16 %v339
  %v569 = vunpack.c.l.b16 %v340
  %v570 = vunpack.c.h.b16 %v340
  %v571 = vunpack.c.l.b16 %v341
  %v572 = vunpack.c.l.b16 %v342
  %v573 = vunpack.c.h.b16 %v342
  %v574 = vunpack.c.l.b16 %v343
  %v575 = vunpack.c.l.b16 %v344
  %v576 = vunpack.c.h.b16 %v344
  %v577 = vunpack.c.l.b16 %v345
  %v578 = vunpack.c.l.b16 %v346
  %v579 = vunpack.c.h.b16 %v346
  %v580 = vunpack.c.l.b16 %v347
  %v581 = vunpack.c.l.b16 %v348
  %v582 = vunpack.c.h.b16 %v348
  %v583 = vunpack.c.l.b16 %v349
  %v584 = vunpack.c.l.b16 %v350
  %v585 = vunpack.c.h.b16 %v350
  %v586 = vunpack.c.l.b16 %v351
  %v587 = vunpack.c.l.b16 %v352
  %v588 = vunpack.c.h.b16 %v352
  %v589 = vunpack.c.l.b16 %v353
  %v590 = vunpack.c.l.b16 %v354
  %v591 = vunpack.c.h.b16 %v354
  %v592 = vunpack.c.l.b16 %v355
  %v593 = vunpack.c.l.b16 %v356
  %v594 = vunpack.c.h.b16 %v356
  %v595 = vunpack.c.l.b16 %v357
  %v596 = vunpack.c.l.b16 %v358
  %v597 = vunpack.c.h.b16 %v358
  %v598 = vunpack.c.l.b16 %v359
  %v599 = vunpack.c.l.b16 %v360
  %v600 = vunpack.c.h.b16 %v360
  %v601 = vunpack.c.l.b16 %v361
  %v602 = vunpack.c.l.b16 %v362
  %v603 = vunpack.c.h.b16 %v362
  %v604 = vunpack.c.l.b16 %v363
  %v605 = vunpack.c.l.b16 %v364
  %v606 = vunpack.c.h.b16 %v364
  %v607 = vunpack.c.l.b16 %v365
  %v608 = vunpack.c.l.b16 %v366
  %v609 = vunpack.c.h.b16 %v366
  %v610 = vunpack.c.l.b16 %v367
  %v611 = vunpack.c.l.b16 %v368
  %v612 = vunpack.c.h.b16 %v368
  %v613 = vunpack.c.l.b16 %v369
  %v614 = vunpack.c.l.b16 %v370
  %v615 = vunpack.c.h.b16 %v370
  %v616 = vunpack.c.l.b16 %v371
  %v617 = vunpack.c.l.b16 %v372
  %v618 = vunpack.c.h.b16 %v372
  %v619 = vunpack.c.l.b16 %v373
  %v620 = vunpack.c.l.b16 %v374
  %v621 = vunpack.c.h.b16 %v374
  %v622 = vunpack.c.l.b16 %v375
  %v623 = vunpack.c.l.b16 %v376
  %v624 = vunpack.c.h.b16 %v376
  %v625 = vunpack.c.l.b16 %v377
  %v626 = vunpack.c.l.b16 %v378
  %v627 = vunpack.c.h.b16 %v378
  %v628 = vunpack.c.l.b16 %v379
  %v629 = vunpack.c.l.b16 %v380
  %v630 = vunpack.c.h.b16 %v380
  %v631 = vunpack.c.l.b16 %v381
  %v632 = vunpack.c.l.b16 %v382
  %v633 = vunpack.c.h.b16 %v382
  %v634 = vunpack.c.l.b16 %v383
  %v635 = vunpack.c.l.b16 %v384
  %v636 = vunpack.c.h.b16 %v384
  %v637 = vunpack.c.l.b16 %v385
  %v638 = vunpack.c.l.b16 %v386
  %v639 = vunpack.c.h.b16 %v386
  %v640 = vunpack.c.l.b16 %v387
  %v641 = vunpack.c.l.b16 %v388
  %v642 = vunpack.c.h.b16 %v388
  %v643 = vunpack.c.l.b16 %v389
  %v644 = vunpack.c.l.b16 %v390
  %v645 = vunpack.c.h.b16 %v390
  %v646 = vunpack.c.l.b16 %v391
  %v647 = vunpack.c.l.b16 %v392
  %v648 = vunpack.c.h.b16 %v392
  %v649 = vunpack.c.l.b16 %v393
  %v650 = vunpack.c.l.b16 %v394
  %v651 = vunpack.c.h.b16 %v394
  %v652 = vunpack.c.l.b16 %v395
  %v653 = vunpack.c.l.b16 %v396
  %v654 = vunpack.c.h.b16 %v396
  %v655 = vunpack.c.l.b16 %v397
  %v656 = vunpack.c.l.b16 %v398
  %v657 = vunpack.c.h.b16 %v398
  %v658 = vunpack.c.l.b16 %v399
  %v659 = vunpack.c.l.b16 %v400
  %v660 = vunpack.c.h.b16 %v400
  %v661 = vunpack.c.l.b16 %v401
  %v662 = vunpack.c.l.b16 %v402
  %v663 = vunpack.c.h.b16 %v402
  %v664 = vunpack.c.l.b16 %v403
  %v665 = vunpack.c.l.b16 %v404
  %v666 = vunpack.c.h.b16 %v404
  %v667 = vunpack.c.l.b16 %v405
  %v668 = vunpack.c.l.b16 %v406
  %v669 = vunpack.c.h.b16 %v406
  %v670 = vunpack.c.l.b16 %v407
  %v671 = vunpack.c.l.b16 %v408
  %v672 = vunpack.c.h.b16 %v408
  %v673 = vunpack.c.l.b16 %v409
  %v674 = vunpack.c.l.b16 %v410
  %v675 = vunpack.c.h.b16 %v410
  %v676 = vunpack.c.l.b16 %v411
  %v677 = vunpack.c.l.b16 %v412
  %v678 = vunpack.c.h.b16 %v412
  %v679 = vunpack.c.l.b16 %v413
  %v680 = vunpack.c.l.b16 %v414
  %v681 = vunpack.c.h.b16 %v414
  %v682 = vunpack.c.l.b16 %v415
  %v683 = vpack.c.b16 %v536, %v533
  %v684 = vpack.c.b16 %v537, %v534
  %v685 = vpack.c.b16 %v538, %v535
  %v686 = vpack.c.b16 %v542, %v539
  %v687 = vpack.c.b16 %v543, %v540
  %v688 = vpack.c.b16 %v544, %v541
  %v689 = vpack.c.b16 %v548, %v545
  %v690 = vpack.c.b16 %v549, %v546
  %v691 = vpack.c.b16 %v550, %v547
  %v692 = vpack.c.b16 %v554, %v551
  %v693 = vpack.c.b16 %v555, %v552
  %v694 = vpack.c.b16 %v556, %v553
  %v695 = vpack.c.b16 %v560, %v557
  %v696 = vpack.c.b16 %v561, %v558
  %v697 = vpack.c.b16 %v562, %v559
  %v698 = vpack.c.b16 %v566, %v563
  %v699 = vpack.c.b16 %v567, %v564
  %v700 = vpack.c.b16 %v568, %v565
  %v701 = vpack.c.b16 %v572, %v569
  %v702 = vpack.c.b16 %v573, %v570
  %v703 = vpack.c.b16 %v574, %v571
  %v704 = vpack.c.b16 %v578, %v575
  %v705 = vpack.c.b16 %v579, %v576
  %v706 = vpack.c.b16 %v580, %v577
  %v707 = vpack.c.b16 %v584, %v581
  %v708 = vpack.c.b16 %v585, %v582
  %v709 = vpack.c.b16 %v586, %v583
  %v710 = vpack.c.b16 %v590, %v587
  %v711 = vpack.c.b16 %v591, %v588
  %v712 = vpack.c.b16 %v592, %v589
  %v713 = vpack.c.b16 %v596, %v593
  %v714 = vpack.c.b16 %v597, %v594
  %v715 = vpack.c.b16 %v598, %v595
  %v716 = vpack.c.b16 %v602, %v599
  %v717 = vpack.c.b16 %v603, %v600
  %v718 = vpack.c.b16 %v604, %v601
  %v719 = vpack.c.b16 %v608, %v605
  %v720 = vpack.c.b16 %v609, %v606
  %v721 = vpack.c.b16 %v610, %v607
  %v722 = vpack.c.b16 %v614, %v611
  %v723 = vpack.c.b16 %v615, %v612
  %v724 = vpack.c.b16 %v616, %v613
  %v725 = vpack.c.b16 %v620, %v617
  %v726 = vpack.c.b16 %v621, %v618
  %v727 = vpack.c.b16 %v622, %v619
  %v728 = vpack.c.b16 %v626, %v623
  %v729 = vpack.c.b16 %v627, %v624
  %v730 = vpack.c.b16 %v628, %v625
  %v731 = vpack.c.b16 %v632, %v629
  %v732 = vpack.c.b16 %v633, %v630
  %v733 = vpack.c.b16 %v634, %v631
  %v734 = vpack.c.b16 %v638, %v635
  %v735 = vpack.c.b16 %v639, %v636
  %v736 = vpack.c.b16 %v640, %v637
  %v737 = vpack.c.b16 %v644, %v641
  %v738 = vpack.c.b16 %v645, %v642
  %v739 = vpack.c.b16 %v646, %v643
  %v740 = vpack.c.b16 %v650, %v647
  %v741 = vpack.c.b16 %v651, %v648
  %v742 = vpack.c.b16 %v652, %v649
  %v743 = vpack.c.b16 %v656, %v653
  %v744 = vpack.c.b16 %v657, %v654
  %v745 = vpack.c.b16 %v658, %v655
  %v746 = vpack.c.b16 %v662, %v659
  %v747 = vpack.c.b16 %v663, %v660
  %v748 = vpack.c.b16 %v664, %v661
  %v749 = vpack.c.b16 %v668, %v665
  %v750 = vpack.c.b16 %v669, %v666
  %v751 = vpack.c.b16 %v670, %v667
  %v752 = vpack.c.b16 %v674, %v671
  %v753 = vpack.c.b16 %v675, %v672
  %v754 = vpack.c.b16 %v676, %v673
  %v755 = vpack.c.b16 %v680, %v677
  %v756 = vpack.c.b16 %v681, %v678
  %v757 = vpack.c.b16 %v682, %v679
  %v834 = vsel %vm180, %v315, 0
  %836 = vmatprep.subr.bf16.mxu0 %v684
  %837 = vmatpush1.bf16.msra.mxu0 %v683
  %838 = vmatprep.subr.bf16.mxu0 %v687
  %839 = vmatpush1.bf16.msra.mxu0 %v686
  %840 = vmatprep.subr.bf16.mxu0 %v690
  %841 = vmatpush1.bf16.msra.mxu0 %v689
  %842 = vmatprep.subr.bf16.mxu0 %v693
  %843 = vmatpush1.bf16.msra.mxu0 %v692
  %844 = vmatprep.subr.bf16.mxu0 %v696
  %845 = vmatpush1.bf16.msra.mxu0 %v695
  %846 = vmatprep.subr.bf16.mxu0 %v699
  %847 = vmatpush1.bf16.msra.mxu0 %v698
  %848 = vmatprep.subr.bf16.mxu0 %v702
  %849 = vmatpush1.bf16.msra.mxu0 %v701
  %850 = vmatprep.subr.bf16.mxu0 %v705
  %851 = vmatpush1.bf16.msra.mxu0 %v704
  %852 = vmatprep.subr.bf16.mxu0 %v708
  %853 = vmatpush1.bf16.msra.mxu0 %v707
  %854 = vmatprep.subr.bf16.mxu0 %v711
  %855 = vmatpush1.bf16.msra.mxu0 %v710
  %856 = vmatprep.subr.bf16.mxu0 %v714
  %857 = vmatpush1.bf16.msra.mxu0 %v713
  %858 = vmatprep.subr.bf16.mxu0 %v717
  %859 = vmatpush1.bf16.msra.mxu0 %v716
  %860 = vmatprep.subr.bf16.mxu0 %v720
  %861 = vmatpush1.bf16.msra.mxu0 %v719
  %862 = vmatprep.subr.bf16.mxu0 %v723
  %863 = vmatpush1.bf16.msra.mxu0 %v722
  %864 = vmatprep.subr.bf16.mxu0 %v726
  %865 = vmatpush1.bf16.msra.mxu0 %v725
  %866 = vmatprep.subr.bf16.mxu0 %v729
  %867 = vmatpush1.bf16.msra.mxu0 %v728
  %868 = vmatprep.mubr.bf16.mxu0 %v313
  %869 = vmatmul.mubr.bf16.gmra.mrb[0].mxu0 %v312
  %v870 = vpop.f32.mrb[0].mxu0
  %v871 = vadd.f32 %v421, %v870
  %v872 = vpop.f32.mrb[0].mxu0
  %v873 = vadd.f32 %v425, %v872
  %v874 = vpop.f32.mrb[0].mxu0
  %v875 = vpop.f32.mrb[0].mxu0
  %876 = vdwg.mxu0
  %877 = vmatprep.subr.bf16.mxu0 %v732
  %878 = vmatpush1.bf16.msra.mxu0 %v731
  %879 = vmatprep.subr.bf16.mxu0 %v735
  %880 = vmatpush1.bf16.msra.mxu0 %v734
  %881 = vmatprep.subr.bf16.mxu0 %v738
  %882 = vmatpush1.bf16.msra.mxu0 %v737
  %883 = vmatprep.subr.bf16.mxu0 %v741
  %884 = vmatpush1.bf16.msra.mxu0 %v740
  %885 = vmatprep.subr.bf16.mxu0 %v744
  %886 = vmatpush1.bf16.msra.mxu0 %v743
  %887 = vmatprep.subr.bf16.mxu0 %v747
  %888 = vmatpush1.bf16.msra.mxu0 %v746
  %889 = vmatprep.subr.bf16.mxu0 %v750
  %890 = vmatpush1.bf16.msra.mxu0 %v749
  %891 = vmatprep.subr.bf16.mxu0 %v753
  %892 = vmatpush1.bf16.msra.mxu0 %v752
  %893 = vmatprep.subr.bf16.mxu0 %v756
  %894 = vmatpush1.bf16.msra.mxu0 %v755
  %895 = vmatprep.subr.bf16.mxu0 0
  %896 = vmatpush1.bf16.msra.mxu0 0
  %897 = vmatprep.subr.bf16.mxu0 0
  %898 = vmatpush1.bf16.msra.mxu0 0
  %899 = vmatprep.subr.bf16.mxu0 0
  %900 = vmatpush1.bf16.msra.mxu0 0
  %901 = vmatprep.subr.bf16.mxu0 0
  %902 = vmatpush1.bf16.msra.mxu0 0
  %903 = vmatprep.subr.bf16.mxu0 0
  %904 = vmatpush1.bf16.msra.mxu0 0
  %905 = vmatprep.subr.bf16.mxu0 0
  %906 = vmatpush1.bf16.msra.mxu0 0
  %907 = vmatprep.subr.bf16.mxu0 0
  %908 = vmatpush1.bf16.msra.mxu0 0
  %909 = vmatprep.mubr.bf16.mxu0 %v834
  %910 = vmatmul.mubr.bf16.gmra.mrb[0].mxu0 %v314
  %v911 = vpop.f32.mrb[0].mxu0
  %v912 = vadd.f32 %v871, %v911
  %v913 = vpop.f32.mrb[0].mxu0
  %v914 = vadd.f32 %v873, %v913
  %v915 = vpop.f32.mrb[0].mxu0
  %v916 = vpop.f32.mrb[0].mxu0
  %917 = vdwg.mxu0
  %918 = vmatprep.subr.bf16.mxu0 0
  %919 = vmatpush1.bf16.msra.mxu0 %v685
  %920 = vmatprep.subr.bf16.mxu0 0
  %921 = vmatpush1.bf16.msra.mxu0 %v688
  %922 = vmatprep.subr.bf16.mxu0 0
  %923 = vmatpush1.bf16.msra.mxu0 %v691
  %924 = vmatprep.subr.bf16.mxu0 0
  %925 = vmatpush1.bf16.msra.mxu0 %v694
  %926 = vmatprep.subr.bf16.mxu0 0
  %927 = vmatpush1.bf16.msra.mxu0 %v697
  %928 = vmatprep.subr.bf16.mxu0 0
  %929 = vmatpush1.bf16.msra.mxu0 %v700
  %930 = vmatprep.subr.bf16.mxu0 0
  %931 = vmatpush1.bf16.msra.mxu0 %v703
  %932 = vmatprep.subr.bf16.mxu0 0
  %933 = vmatpush1.bf16.msra.mxu0 %v706
  %934 = vmatprep.subr.bf16.mxu0 0
  %935 = vmatpush1.bf16.msra.mxu0 %v709
  %936 = vmatprep.subr.bf16.mxu0 0
  %937 = vmatpush1.bf16.msra.mxu0 %v712
  %938 = vmatprep.subr.bf16.mxu0 0
  %939 = vmatpush1.bf16.msra.mxu0 %v715
  %940 = vmatprep.subr.bf16.mxu0 0
  %941 = vmatpush1.bf16.msra.mxu0 %v718
  %942 = vmatprep.subr.bf16.mxu0 0
  %943 = vmatpush1.bf16.msra.mxu0 %v721
  %944 = vmatprep.subr.bf16.mxu0 0
  %945 = vmatpush1.bf16.msra.mxu0 %v724
  %946 = vmatprep.subr.bf16.mxu0 0
  %947 = vmatpush1.bf16.msra.mxu0 %v727
  %948 = vmatprep.subr.bf16.mxu0 0
  %949 = vmatpush1.bf16.msra.mxu0 %v730
  %950 = vmatprep.mubr.bf16.mxu0 %v313
  %951 = vmatmul.mubr.bf16.gmra.mrb[0].mxu0 %v312
  %v952 = vpop.f32.mrb[0].mxu0
  %v953 = vadd.f32 %v429, %v952
  %v954 = vpop.f32.mrb[0].mxu0
  %v955 = vpop.f32.mrb[0].mxu0
  %v956 = vpop.f32.mrb[0].mxu0
  %957 = vdwg.mxu0
  %958 = vmatprep.subr.bf16.mxu0 0
  %959 = vmatpush1.bf16.msra.mxu0 %v733
  %960 = vmatprep.subr.bf16.mxu0 0
  %961 = vmatpush1.bf16.msra.mxu0 %v736
  %962 = vmatprep.subr.bf16.mxu0 0
  %963 = vmatpush1.bf16.msra.mxu0 %v739
  %964 = vmatprep.subr.bf16.mxu0 0
  %965 = vmatpush1.bf16.msra.mxu0 %v742
  %966 = vmatprep.subr.bf16.mxu0 0
  %967 = vmatpush1.bf16.msra.mxu0 %v745
  %968 = vmatprep.subr.bf16.mxu0 0
  %969 = vmatpush1.bf16.msra.mxu0 %v748
  %970 = vmatprep.subr.bf16.mxu0 0
  %971 = vmatpush1.bf16.msra.mxu0 %v751
  %972 = vmatprep.subr.bf16.mxu0 0
  %973 = vmatpush1.bf16.msra.mxu0 %v754
  %974 = vmatprep.subr.bf16.mxu0 0
  %975 = vmatpush1.bf16.msra.mxu0 %v757
  %976 = vmatprep.subr.bf16.mxu0 0
  %977 = vmatpush1.bf16.msra.mxu0 0
  %978 = vmatprep.subr.bf16.mxu0 0
  %979 = vmatpush1.bf16.msra.mxu0 0
  %980 = vmatprep.subr.bf16.mxu0 0
  %981 = vmatpush1.bf16.msra.mxu0 0
  %982 = vmatprep.subr.bf16.mxu0 0
  %983 = vmatpush1.bf16.msra.mxu0 0
  %984 = vmatprep.subr.bf16.mxu0 0
  %985 = vmatpush1.bf16.msra.mxu0 0
  %986 = vmatprep.subr.bf16.mxu0 0
  %987 = vmatpush1.bf16.msra.mxu0 0
  %988 = vmatprep.subr.bf16.mxu0 0
  %989 = vmatpush1.bf16.msra.mxu0 0
  %990 = vmatprep.mubr.bf16.mxu0 %v834
  %991 = vmatmul.mubr.bf16.gmra.mrb[0].mxu0 %v314
  %v992 = vpop.f32.mrb[0].mxu0
  %v993 = vadd.f32 %v953, %v992
  %v994 = vpop.f32.mrb[0].mxu0
  %v995 = vpop.f32.mrb[0].mxu0
  %v996 = vpop.f32.mrb[0].mxu0
  %997 = vdwg.mxu0
  %v998 = vmax.f32 %v912, 0.0
  %v999 = vmax.f32 %v914, 0.0
  %v1000 = vmax.f32 %v993, 0.0
  %v1001 = vld [vmem:[%s10] sm:$0xff]
  %v1002 = vld [vmem:[%s10 + $0x8] sm:$0xff]
  %v1003 = vld [vmem:[%s10 + $0x10] sm:$0xff]
  %vm1004 = vcmp.ge.f32.partialorder %v1001, 0.1
  %vm1005 = vcmp.ge.f32.partialorder %v1002, 0.1
  %vm1006 = vcmp.ge.f32.partialorder %v1003, 0.1
  %v1007 = vmul.f32 %v998, 1.1111112
  %v1008 = vmul.f32 %v999, 1.1111112
  %v1009 = vmul.f32 %v1000, 1.1111112
  %v1010 = vsel %vm1004, %v1007, 0.0
  %v1011 = vsel %vm1005, %v1008, 0.0
  %v1012 = vsel %vm1006, %v1009, 0.0
  %v1013 = vld [vmem:[%s7] sm:$0x7]
  %v1015 = vlaneseq
  %v1016 = vshrl.u32 %v1015, 7
  %v1017 = vsub.s32 0, %v1016
  %v1018 = vrot.slane %v1013, %v1017
  %v1019 = vlaneseq
  %v1020 = vshrl.u32 %v1019, 7
  %v1021 = vsub.s32 1, %v1020
  %v1022 = vrot.slane %v1013, %v1021
  %v1023 = vlaneseq
  %v1024 = vshrl.u32 %v1023, 7
  %v1025 = vsub.s32 2, %v1024
  %v1026 = vrot.slane %v1013, %v1025
  %v1030 = vmul.f32 %v1010, %v1018
  %v1031 = vmul.f32 %v1011, %v1022
  %v1032 = vmul.f32 %v1012, %v1026
  %v1033 = vadd.f32 %v1030, %v1031
  %vm1034 = vcmask 359424
  %v1035 = vsel %vm1034, %v1032, 0.0
  %v1036 = vadd.f32 %v1033, %v1035
  %1037 = vadd.xlane.f32.xlu0 %v1036
  %v1038 = vpop.xlane.xlu0 %1037
  %v1039 = vld [vmem:[#allocation2] sm:$0x1]
  %v1041 = vlaneseq
  %v1042 = vshrl.u32 %v1041, 7
  %v1043 = vsub.s32 0, %v1042
  %v1044 = vrot.slane %v1039, %v1043
  %v1046 = vadd.f32 %v1038, %v1044
  %vm1047 = vcmask 7168
  %1048 = vst.msk [vmem:[%s11] sm:$0xff] %vm1047, %v1046
  // Predicated region
  $region46: #{critic_dropout_forward.3} parent=0 // pred_check
    _
  $region47: #{critic_dropout_forward.3} parent=0 // pred_check_branch
    %1050 = sbr.rel (0) target = $region49
  $region48: #{critic_dropout_forward.3} parent=0 // pred_region
    _
  $region49: #{critic_dropout_forward.3} parent=0 // pred_fallthru
    _
  // Predicated region
  $region50: #{critic_dropout_forward.3} parent=0 // pred_check
    _
  $region51: #{critic_dropout_forward.3} parent=0 // pred_check_branch
    %1052 = sbr.rel (0) target = $region53
  $region52: #{critic_dropout_forward.3} parent=0 // pred_region
    _
  $region53: #{critic_dropout_forward.3} parent=0 // pred_fallthru
    _

</llo_original>
